<compile_context>
chip_gen: v7x
topology: tpu7x:2x2x1
jax: 0.10.0
libtpu: 0.0.40
codegen_flags: <defaults>
</compile_context>

<pallas_src>
import functools
import re

import jax
import jax.numpy as jnp
from jax.experimental import pallas as pl
from jax.experimental.pallas import tpu as pltpu


_SQRT_HALF = 0.7071067811865476


def _round_up(n, m):
    return ((n + m - 1) // m) * m


def _tpu_generation():
    """Best-effort TPU generation (5, 6, 7, ...); 0 if unknown."""
    try:
        kind = jax.devices()[0].device_kind.lower()
    except Exception:
        return 0
    m = re.search(r"v(\d+)", kind)
    return int(m.group(1)) if m else 0


def _vmem_capacity_bytes(gen):
    try:
        return int(pltpu.get_tpu_info().vmem_capacity_bytes)
    except Exception:
        return (64 if gen >= 7 else 128) * 1024 * 1024


def _tile_footprint(rt, ht, dim, nk, itm, itx, ew_bytes, weight_buf):
    """Approximate VMEM bytes for one grid step's working set."""
    w = 2 * dim * ht * itm * weight_buf                 # w1 + w2 blocks
    small = (3 * dim + ht) * 4 * 2                      # gamma/beta/b2 + b1 chunk
    io = 2 * 2 * rt * dim * itx                         # x + out, double-buffered
    xn = rt * dim * itm if nk > 1 else 0                # normalized-row stash
    acc = rt * dim * 4 if nk > 1 else 0                 # fp32 accumulator
    h = 2 * rt * ht * ew_bytes                          # live hidden intermediate
    return w + small + io + xn + acc + h


def _choose_tiles(N, dim, hidden, itm, itx, ew_bytes, vmem_bytes):
    """Pick (row_tile, hidden_tile, resident) from the per-generation VMEM budget.

    resident=True  -> nk == 1: full weights stay resident in VMEM (no re-streaming).
    resident=False -> hidden is tiled; weights are re-streamed once per row tile, so
                      row_tile is kept as large as possible for weight reuse.
    """
    budget = int(vmem_bytes * 0.72)
    n_cap = _round_up(max(N, 16), 16)

    rows = []
    for c in (1024, 512, 256, 128, 64, 32, 16):
        rc = min(c, n_cap)
        if rc not in rows:
            rows.append(rc)                              # descending, multiples of 16

    # Phase 1: full-weight residency (zero weight re-streaming), single-buffered.
    for rt in rows:
        if _tile_footprint(rt, hidden, dim, 1, itm, itx, ew_bytes, 1) <= budget:
            # Megacore nudge: give the 'parallel' row axis >= 2 steps when cheap.
            if rt >= n_cap and n_cap > 512:
                rt2 = _round_up((n_cap + 1) // 2, 256)
                if _tile_footprint(rt2, hidden, dim, 1, itm, itx, ew_bytes, 1) <= budget:
                    rt = rt2
            return rt, hidden, True

    # Phase 2: tile the hidden axis; favor the largest row tile (weight reuse).
    for rt in rows:
        ht = min(_round_up(hidden, 128), 4096)
        while ht >= 128:
            if _tile_footprint(rt, ht, dim, 2, itm, itx, ew_bytes, 2) <= budget:
                return rt, ht, False
            ht -= 128

    # Phase 3: last resort (tiny VMEM / huge dim).
    return rows[-1], 128, False


def _gelu(h, use_tanh):
    if use_tanh:
        # tanh approximation -> EUP slot (effectively free next to MXU work).
        return jax.nn.gelu(h, approximate=True)
    # Exact erf formulation (PyTorch nn.GELU() default).
    return 0.5 * h * (1.0 + jax.lax.erf(h * jnp.asarray(_SQRT_HALF, h.dtype)))


def _layernorm_f32(x_ref, gamma_ref, beta_ref, eps):
    x = x_ref[...].astype(jnp.float32)
    mean = jnp.mean(x, axis=-1, keepdims=True)
    c = x - mean
    var = jnp.mean(c * c, axis=-1, keepdims=True)
    xn = c * jax.lax.rsqrt(var + eps)
    return xn * gamma_ref[...].astype(jnp.float32) + beta_ref[...].astype(jnp.float32)


def _ffn_kernel_resident(x_ref, gamma_ref, beta_ref, w1_ref, b1_ref, w2_ref,
                         b2_ref, o_ref, *, eps, use_tanh_gelu, ew_bf16):
    """nk == 1: full weights resident; no accumulator round-trip."""
    xn = _layernorm_f32(x_ref, gamma_ref, beta_ref, eps)
    h = jnp.dot(xn.astype(w1_ref.dtype), w1_ref[...],
                preferred_element_type=jnp.float32)
    if ew_bf16:
        h = h.astype(jnp.bfloat16) + b1_ref[...].astype(jnp.bfloat16)
    else:
        h = h + b1_ref[...].astype(jnp.float32)
    h = _gelu(h, use_tanh_gelu)
    out = jnp.dot(h.astype(w2_ref.dtype), w2_ref[...],
                  preferred_element_type=jnp.float32)
    o_ref[...] = (out + b2_ref[...].astype(jnp.float32)).astype(o_ref.dtype)


def _ffn_kernel_tiled(x_ref, gamma_ref, beta_ref, w1_ref, b1_ref, w2_ref,
                      b2_ref, o_ref, xn_ref, acc_ref, *, eps, use_tanh_gelu, ew_bf16):
    """nk > 1: hidden axis tiled; LayerNorm once per row tile, fp32 accumulator."""
    k = pl.program_id(1)

    @pl.when(k == 0)
    def _():
        xn = _layernorm_f32(x_ref, gamma_ref, beta_ref, eps)
        xn_ref[...] = xn.astype(xn_ref.dtype)
        acc_ref[...] = jnp.zeros_like(acc_ref)

    h = jnp.dot(xn_ref[...], w1_ref[...], preferred_element_type=jnp.float32)
    if ew_bf16:
        h = h.astype(jnp.bfloat16) + b1_ref[...].astype(jnp.bfloat16)
    else:
        h = h + b1_ref[...].astype(jnp.float32)
    h = _gelu(h, use_tanh_gelu)
    acc_ref[...] += jnp.dot(h.astype(w2_ref.dtype), w2_ref[...],
                            preferred_element_type=jnp.float32)

    @pl.when(k == pl.num_programs(1) - 1)
    def _():
        o_ref[...] = (acc_ref[...] + b2_ref[...].astype(jnp.float32)).astype(o_ref.dtype)


def causal_ffn(x, gamma, beta, w1, b1, w2, b2, *, eps=1e-5,
               row_tile=None, hidden_tile=None,
               matmul_dtype=jnp.bfloat16, gelu="auto",
               vmem_limit_bytes=None):
    """x: (B, S, dim) -> (B, S, dim).  Weights stored (in, out): w1 (dim, hidden),
    w2 (hidden, dim).  gelu in {"auto", "exact", "tanh"}."""
    B, S, dim = x.shape
    hidden = w1.shape[1]
    N = B * S

    gen = _tpu_generation()
    matmul_dtype = jnp.dtype(matmul_dtype)
    bf16_mm = matmul_dtype == jnp.dtype(jnp.bfloat16)

    # GELU flavor / elementwise dtype, generation-gated:
    #   v6e/v7x: tanh-GELU on the EUP + bf16 elementwise (relieves the VALU slot).
    #   v5e / unknown / fp32-parity: exact-erf fp32 (no bf16 VPU/EUP on v5e).
    if gelu == "auto":
        fast = bf16_mm and gen >= 6
        use_tanh_gelu, ew_bf16 = fast, fast
    elif gelu == "tanh":
        use_tanh_gelu, ew_bf16 = True, (bf16_mm and gen >= 6)
    else:  # "exact"
        use_tanh_gelu, ew_bf16 = False, False

    itm = matmul_dtype.itemsize
    itx = jnp.dtype(x.dtype).itemsize
    ew_bytes = 2 if ew_bf16 else 4
    vmem_cap = _vmem_capacity_bytes(gen)

    # ---- tiling: VMEM-budget aware, prefers full weight residency (nk == 1) ----
    if row_tile is None or hidden_tile is None:
        auto_rt, auto_ht, resident = _choose_tiles(N, dim, hidden, itm, itx,
                                                   ew_bytes, vmem_cap)
        if row_tile is None:
            row_tile = auto_rt
        if hidden_tile is None:
            hidden_tile = hidden if resident else auto_ht
    row_tile = max(16, _round_up(int(row_tile), 16))

    if hidden_tile >= hidden:
        hidden_tile, hidden_pad, nk = hidden, hidden, 1
    else:
        hidden_tile = max(128, _round_up(int(hidden_tile), 128))
        hidden_pad = _round_up(hidden, hidden_tile)   # zero-pad is exact: GELU(0)=0
        nk = hidden_pad // hidden_tile

    n_pad = _round_up(N, row_tile)
    n_rows = n_pad // row_tile
    x2d = x.reshape(N, dim)
    if n_pad != N:
        x2d = jnp.pad(x2d, ((0, n_pad - N), (0, 0)))

    # ---- parameters (weights pre-cast so HBM->VMEM traffic is halved too) ----
    w1m = w1.astype(matmul_dtype)
    w2m = w2.astype(matmul_dtype)
    b1f = b1.astype(jnp.float32)
    if hidden_pad != hidden:
        w1m = jnp.pad(w1m, ((0, 0), (0, hidden_pad - hidden)))
        w2m = jnp.pad(w2m, ((0, hidden_pad - hidden), (0, 0)))
        b1f = jnp.pad(b1f, ((0, hidden_pad - hidden),))
    gamma2 = gamma.reshape(1, dim).astype(jnp.float32)
    beta2 = beta.reshape(1, dim).astype(jnp.float32)
    b1_2 = b1f.reshape(1, hidden_pad)
    b2_2 = b2.reshape(1, dim).astype(jnp.float32)

    # ---- explicit scoped-VMEM ceiling from the actual tile footprint ----
    if vmem_limit_bytes is None:
        need = _tile_footprint(row_tile, hidden_tile, dim, nk, itm, itx, ew_bytes,
                               1 if nk == 1 else 2)
        vmem_limit_bytes = min(int(vmem_cap * 0.9),
                               max(16 << 20, int(need * 1.3) + (4 << 20)))
    vmem_limit_bytes = int(vmem_limit_bytes)

    # ---- advisory cost estimate for XLA's scheduler ----
    weight_bytes = (w1m.size + w2m.size) * itm * (n_rows if nk > 1 else 1)
    cost = pl.CostEstimate(
        flops=int(4 * N * dim * hidden),
        transcendentals=int(N * hidden),
        bytes_accessed=int(2 * N * dim * itx + weight_bytes + (hidden_pad + 3 * dim) * 4),
    )

    if nk == 1:
        kernel = functools.partial(_ffn_kernel_resident, eps=eps,
                                   use_tanh_gelu=use_tanh_gelu, ew_bf16=ew_bf16)
        grid = (n_rows,)
        dims = ("parallel",)
        scratch = []

        def build_specs(single_buffer_weights):
            wkw = {"pipeline_mode": pl.Buffered(1)} if single_buffer_weights else {}
            in_specs = [
                pl.BlockSpec((row_tile, dim), lambda i: (i, 0)),            # x rows
                pl.BlockSpec((1, dim), lambda i: (0, 0)),                   # gamma
                pl.BlockSpec((1, dim), lambda i: (0, 0)),                   # beta
                pl.BlockSpec((dim, hidden_pad), lambda i: (0, 0), **wkw),   # w1 (resident)
                pl.BlockSpec((1, hidden_pad), lambda i: (0, 0)),            # b1
                pl.BlockSpec((hidden_pad, dim), lambda i: (0, 0), **wkw),   # w2 (resident)
                pl.BlockSpec((1, dim), lambda i: (0, 0)),                   # b2
            ]
            out_spec = pl.BlockSpec((row_tile, dim), lambda i: (i, 0))
            return in_specs, out_spec
    else:
        kernel = functools.partial(_ffn_kernel_tiled, eps=eps,
                                   use_tanh_gelu=use_tanh_gelu, ew_bf16=ew_bf16)
        grid = (n_rows, nk)
        dims = ("parallel", "arbitrary")
        scratch = [pltpu.VMEM((row_tile, dim), matmul_dtype),    # normalized rows
                   pltpu.VMEM((row_tile, dim), jnp.float32)]     # fp32 accumulator

        def build_specs(single_buffer_weights):
            del single_buffer_weights  # weight chunks vary along k: keep double buffering
            in_specs = [
                pl.BlockSpec((row_tile, dim), lambda i, k: (i, 0)),         # x rows
                pl.BlockSpec((1, dim), lambda i, k: (0, 0)),                # gamma
                pl.BlockSpec((1, dim), lambda i, k: (0, 0)),                # beta
                pl.BlockSpec((dim, hidden_tile), lambda i, k: (0, k)),      # w1 chunk
                pl.BlockSpec((1, hidden_tile), lambda i, k: (0, k)),        # b1 chunk
                pl.BlockSpec((hidden_tile, dim), lambda i, k: (k, 0)),      # w2 chunk
                pl.BlockSpec((1, dim), lambda i, k: (0, 0)),                # b2
            ]
            out_spec = pl.BlockSpec((row_tile, dim), lambda i, k: (i, 0))
            return in_specs, out_spec

    def run(single_buffer_weights):
        in_specs, out_spec = build_specs(single_buffer_weights)
        return pl.pallas_call(
            kernel,
            out_shape=jax.ShapeDtypeStruct((n_pad, dim), x.dtype),
            grid_spec=pltpu.PrefetchScalarGridSpec(
                num_scalar_prefetch=0,
                grid=grid,
                in_specs=in_specs,
                out_specs=out_spec,
                scratch_shapes=scratch,
            ),
            compiler_params=pltpu.CompilerParams(
                dimension_semantics=dims,
                vmem_limit_bytes=vmem_limit_bytes,
            ),
            cost_estimate=cost,
        )(x2d, gamma2, beta2, w1m, b1_2, w2m, b2_2)

    if nk == 1:
        try:
            out2d = run(True)
        except (TypeError, ValueError, NotImplementedError, pltpu.LoweringException):
            # pl.Buffered(1) single-buffering rejected on this jax build: fall back to
            # default double buffering (perf-only difference; runtime errors propagate).
            out2d = run(False)
    else:
        out2d = run(False)

    if n_pad != N:
        out2d = out2d[:N]
    return out2d.reshape(B, S, dim)


def _reference(x, gamma, beta, w1, b1, w2, b2, eps=1e-5):
    xf = x.astype(jnp.float32)
    mean = jnp.mean(xf, axis=-1, keepdims=True)
    var = jnp.mean((xf - mean) ** 2, axis=-1, keepdims=True)
    xn = (xf - mean) * jax.lax.rsqrt(var + eps) * gamma + beta
    h = xn @ w1 + b1
    h = 0.5 * h * (1.0 + jax.lax.erf(h / jnp.sqrt(2.0)))
    return (h @ w2 + b2).astype(x.dtype)


if __name__ == "__main__":
    B, S, dim = 2, 8, 32
    ff_mult = 4
    hidden = dim * ff_mult

    key = jax.random.PRNGKey(0)
    kx, kw1, kb1, kw2, kb2, kw1b, kw2b = jax.random.split(key, 7)

    x = jax.random.normal(kx, (B, S, dim), dtype=jnp.float32)

    gamma = jnp.ones((dim,), jnp.float32)
    beta = jnp.zeros((dim,), jnp.float32)
    # nn.Linear-style uniform(-1/sqrt(fan_in), 1/sqrt(fan_in)); stored as (in, out).
    lim1 = 1.0 / jnp.sqrt(jnp.float32(dim))
    w1 = jax.random.uniform(kw1, (dim, hidden), jnp.float32, -lim1, lim1)
    b1 = jax.random.uniform(kb1, (hidden,), jnp.float32, -lim1, lim1)
    lim2 = 1.0 / jnp.sqrt(jnp.float32(hidden))
    w2 = jax.random.uniform(kw2, (hidden, dim), jnp.float32, -lim2, lim2)
    b2 = jax.random.uniform(kb2, (dim,), jnp.float32, -lim2, lim2)

    ref = _reference(x, gamma, beta, w1, b1, w2, b2)

    # 1) fp32 MXU operands + exact-erf GELU (closest to PyTorch numerics).
    out_f32 = jax.block_until_ready(
        causal_ffn(x, gamma, beta, w1, b1, w2, b2,
                   matmul_dtype=jnp.float32, gelu="exact"))
    assert out_f32.shape == (B, S, dim)
    assert jnp.allclose(out_f32, ref, atol=2e-5, rtol=2e-5), "fp32 path mismatch"

    # 2) Fast default path (bf16 MXU; gen-gated tanh-GELU/bf16 elementwise on v6e/v7x).
    out_bf = jax.block_until_ready(causal_ffn(x, gamma, beta, w1, b1, w2, b2))
    assert out_bf.shape == (B, S, dim)
    assert jnp.allclose(out_bf, ref, atol=3e-2, rtol=3e-2), "bf16 auto path mismatch"

    # 3) bf16 with exact-erf GELU forced (the v5e-style elementwise path).
    out_exact = jax.block_until_ready(
        causal_ffn(x, gamma, beta, w1, b1, w2, b2, gelu="exact"))
    assert jnp.allclose(out_exact, ref, atol=3e-2, rtol=3e-2), "bf16 exact path mismatch"

    # 4) Hidden-tiled (nk>1) path with hidden padding: hidden=200 forced to 128-chunks.
    hidden_b = 200
    lim1b = 1.0 / jnp.sqrt(jnp.float32(dim))
    w1b = jax.random.uniform(kw1b, (dim, hidden_b), jnp.float32, -lim1b, lim1b)
    b1b = jax.random.uniform(kb1, (hidden_b,), jnp.float32, -lim1b, lim1b)
    lim2b = 1.0 / jnp.sqrt(jnp.float32(hidden_b))
    w2b = jax.random.uniform(kw2b, (hidden_b, dim), jnp.float32, -lim2b, lim2b)
    b2b = jax.random.uniform(kb2, (dim,), jnp.float32, -lim2b, lim2b)
    out_tiled = jax.block_until_ready(
        causal_ffn(x, gamma, beta, w1b, b1b, w2b, b2b, hidden_tile=128))
    ref_tiled = _reference(x, gamma, beta, w1b, b1b, w2b, b2b)
    assert jnp.allclose(out_tiled, ref_tiled, atol=3e-2, rtol=3e-2), "tiled path mismatch"

    # 5) Ragged row count exercises the padded final row tile.
    x_rag = jax.random.normal(kx, (3, 5, dim), dtype=jnp.float32)
    out_rag = jax.block_until_ready(causal_ffn(x_rag, gamma, beta, w1, b1, w2, b2))
    ref_rag = _reference(x_rag, gamma, beta, w1, b1, w2, b2)
    assert jnp.allclose(out_rag, ref_rag, atol=3e-2, rtol=3e-2), "ragged path mismatch"

    print("KERNEL_OK")
</pallas_src>

<mosaic_0001>
module attributes {stable_mosaic.version = 11 : i64} {
  func.func @_ffn_kernel_resident(%arg0: i32, %arg1: memref<16x32xf32, #tpu.memory_space<vmem>>, %arg2: memref<1x32xf32, #tpu.memory_space<vmem>>, %arg3: memref<1x32xf32, #tpu.memory_space<vmem>>, %arg4: memref<32x128xf32, #tpu.memory_space<vmem>>, %arg5: memref<1x128xf32, #tpu.memory_space<vmem>>, %arg6: memref<128x32xf32, #tpu.memory_space<vmem>>, %arg7: memref<1x32xf32, #tpu.memory_space<vmem>>, %arg8: memref<16x32xf32, #tpu.memory_space<vmem>>) attributes {dimension_semantics = [#tpu.dimension_semantics<parallel>], iteration_bounds = array<i64: 1>, scalar_prefetch = 0 : i64, scratch_operands = 0 : i64, tpu.core_type = #tpu.core_type<tc>, window_params = [{transform_indices = @transform_0, window_bounds = array<i64: 16, 32>}, {pipeline_mode = #tpu.pipeline_mode<synchronous>, transform_indices = @transform_1, window_bounds = array<i64: 1, 32>}, {pipeline_mode = #tpu.pipeline_mode<synchronous>, transform_indices = @transform_2, window_bounds = array<i64: 1, 32>}, {pipeline_mode = #tpu.pipeline_mode<synchronous>, transform_indices = @transform_3, window_bounds = array<i64: 32, 128>}, {pipeline_mode = #tpu.pipeline_mode<synchronous>, transform_indices = @transform_4, window_bounds = array<i64: 1, 128>}, {pipeline_mode = #tpu.pipeline_mode<synchronous>, transform_indices = @transform_5, window_bounds = array<i64: 128, 32>}, {pipeline_mode = #tpu.pipeline_mode<synchronous>, transform_indices = @transform_6, window_bounds = array<i64: 1, 32>}, {transform_indices = @transform_7, window_bounds = array<i64: 16, 32>}]} {
    %c0 = arith.constant 0 : index
    %c0_0 = arith.constant 0 : index
    %0 = vector.load %arg1[%c0, %c0_0] : memref<16x32xf32, #tpu.memory_space<vmem>>, vector<16x32xf32>
    %cst = arith.constant dense<0.000000e+00> : vector<16xf32>
    %1 = vector.multi_reduction <add>, %0, %cst [1] : vector<16x32xf32> to vector<16xf32>
    %2 = vector.shape_cast %1 : vector<16xf32> to vector<16x1xf32>
    %cst_1 = arith.constant 3.200000e+01 : f32
    %3 = vector.broadcast %cst_1 : f32 to vector<16x1xf32>
    %4 = arith.divf %2, %3 : vector<16x1xf32>
    %5 = vector.broadcast %4 : vector<16x1xf32> to vector<16x32xf32>
    %6 = arith.subf %0, %5 : vector<16x32xf32>
    %7 = arith.mulf %6, %6 : vector<16x32xf32>
    %cst_2 = arith.constant dense<0.000000e+00> : vector<16xf32>
    %8 = vector.multi_reduction <add>, %7, %cst_2 [1] : vector<16x32xf32> to vector<16xf32>
    %9 = vector.shape_cast %8 : vector<16xf32> to vector<16x1xf32>
    %cst_3 = arith.constant 3.200000e+01 : f32
    %10 = vector.broadcast %cst_3 : f32 to vector<16x1xf32>
    %11 = arith.divf %9, %10 : vector<16x1xf32>
    %cst_4 = arith.constant 9.99999974E-6 : f32
    %12 = vector.broadcast %cst_4 : f32 to vector<16x1xf32>
    %13 = arith.addf %11, %12 : vector<16x1xf32>
    %14 = math.rsqrt %13 : vector<16x1xf32>
    %15 = vector.broadcast %14 : vector<16x1xf32> to vector<16x32xf32>
    %16 = arith.mulf %6, %15 : vector<16x32xf32>
    %c0_5 = arith.constant 0 : index
    %c0_6 = arith.constant 0 : index
    %17 = vector.load %arg2[%c0_5, %c0_6] : memref<1x32xf32, #tpu.memory_space<vmem>>, vector<1x32xf32>
    %18 = vector.broadcast %17 : vector<1x32xf32> to vector<16x32xf32>
    %19 = arith.mulf %16, %18 : vector<16x32xf32>
    %c0_7 = arith.constant 0 : index
    %c0_8 = arith.constant 0 : index
    %20 = vector.load %arg3[%c0_7, %c0_8] : memref<1x32xf32, #tpu.memory_space<vmem>>, vector<1x32xf32>
    %21 = vector.broadcast %20 : vector<1x32xf32> to vector<16x32xf32>
    %22 = arith.addf %19, %21 : vector<16x32xf32>
    %c0_9 = arith.constant 0 : index
    %c0_10 = arith.constant 0 : index
    %23 = vector.load %arg4[%c0_9, %c0_10] : memref<32x128xf32, #tpu.memory_space<vmem>>, vector<32x128xf32>
    %cst_11 = arith.constant dense<0.000000e+00> : vector<16x128xf32>
    %24 = tpu.matmul %22, %23, %cst_11 {dimension_numbers = #tpu.dot_dimension_numbers<[1], [0], [0], [1], [0, 0, 1, 1], [], []>} : vector<16x32xf32>, vector<32x128xf32>, vector<16x128xf32> -> vector<16x128xf32>
    %c0_12 = arith.constant 0 : index
    %c0_13 = arith.constant 0 : index
    %25 = vector.load %arg5[%c0_12, %c0_13] : memref<1x128xf32, #tpu.memory_space<vmem>>, vector<1x128xf32>
    %26 = vector.broadcast %25 : vector<1x128xf32> to vector<16x128xf32>
    %27 = arith.addf %24, %26 : vector<16x128xf32>
    %cst_14 = arith.constant 5.000000e-01 : f32
    %28 = vector.broadcast %cst_14 : f32 to vector<16x128xf32>
    %29 = arith.mulf %28, %27 : vector<16x128xf32>
    %cst_15 = arith.constant 0.707106769 : f32
    %30 = vector.broadcast %cst_15 : f32 to vector<16x128xf32>
    %31 = arith.mulf %27, %30 : vector<16x128xf32>
    %32 = math.erf %31 : vector<16x128xf32>
    %cst_16 = arith.constant 1.000000e+00 : f32
    %33 = vector.broadcast %cst_16 : f32 to vector<16x128xf32>
    %34 = arith.addf %33, %32 : vector<16x128xf32>
    %35 = arith.mulf %29, %34 : vector<16x128xf32>
    %c0_17 = arith.constant 0 : index
    %c0_18 = arith.constant 0 : index
    %36 = vector.load %arg6[%c0_17, %c0_18] : memref<128x32xf32, #tpu.memory_space<vmem>>, vector<128x32xf32>
    %cst_19 = arith.constant dense<0.000000e+00> : vector<16x32xf32>
    %37 = tpu.matmul %35, %36, %cst_19 {dimension_numbers = #tpu.dot_dimension_numbers<[1], [0], [0], [1], [0, 0, 1, 1], [], []>} : vector<16x128xf32>, vector<128x32xf32>, vector<16x32xf32> -> vector<16x32xf32>
    %c0_20 = arith.constant 0 : index
    %c0_21 = arith.constant 0 : index
    %38 = vector.load %arg7[%c0_20, %c0_21] : memref<1x32xf32, #tpu.memory_space<vmem>>, vector<1x32xf32>
    %39 = vector.broadcast %38 : vector<1x32xf32> to vector<16x32xf32>
    %40 = arith.addf %37, %39 : vector<16x32xf32>
    %c0_22 = arith.constant 0 : index
    %c0_23 = arith.constant 0 : index
    %41 = vector.load %arg8[%c0_22, %c0_23] : memref<16x32xf32, #tpu.memory_space<vmem>>, vector<16x32xf32>
    tpu.vector_store %arg8[%c0_22, %c0_23], %40 {strides = array<i32>} : memref<16x32xf32, #tpu.memory_space<vmem>>, vector<16x32xf32>,
    return
  }
  func.func @transform_0(%arg0: i32) -> (i32, i32) {
    %c0_i32 = arith.constant 0 : i32
    %c0_i32_0 = arith.constant 0 : i32
    return %arg0, %c0_i32 : i32, i32
  }
  func.func @transform_1(%arg0: i32) -> (i32, i32) {
    %c0_i32 = arith.constant 0 : i32
    %c0_i32_0 = arith.constant 0 : i32
    %c0_i32_1 = arith.constant 0 : i32
    return %c0_i32, %c0_i32_0 : i32, i32
  }
  func.func @transform_2(%arg0: i32) -> (i32, i32) {
    %c0_i32 = arith.constant 0 : i32
    %c0_i32_0 = arith.constant 0 : i32
    %c0_i32_1 = arith.constant 0 : i32
    return %c0_i32, %c0_i32_0 : i32, i32
  }
  func.func @transform_3(%arg0: i32) -> (i32, i32) {
    %c0_i32 = arith.constant 0 : i32
    %c0_i32_0 = arith.constant 0 : i32
    %c0_i32_1 = arith.constant 0 : i32
    return %c0_i32, %c0_i32_0 : i32, i32
  }
  func.func @transform_4(%arg0: i32) -> (i32, i32) {
    %c0_i32 = arith.constant 0 : i32
    %c0_i32_0 = arith.constant 0 : i32
    %c0_i32_1 = arith.constant 0 : i32
    return %c0_i32, %c0_i32_0 : i32, i32
  }
  func.func @transform_5(%arg0: i32) -> (i32, i32) {
    %c0_i32 = arith.constant 0 : i32
    %c0_i32_0 = arith.constant 0 : i32
    %c0_i32_1 = arith.constant 0 : i32
    return %c0_i32, %c0_i32_0 : i32, i32
  }
  func.func @transform_6(%arg0: i32) -> (i32, i32) {
    %c0_i32 = arith.constant 0 : i32
    %c0_i32_0 = arith.constant 0 : i32
    %c0_i32_1 = arith.constant 0 : i32
    return %c0_i32, %c0_i32_0 : i32, i32
  }
  func.func @transform_7(%arg0: i32) -> (i32, i32) {
    %c0_i32 = arith.constant 0 : i32
    %c0_i32_0 = arith.constant 0 : i32
    return %arg0, %c0_i32 : i32, i32
  }
}

</mosaic_0001>

<llo_original>
// kernel: tpu_custom_call.1
$region0: #{tpu_custom_call.1}
  #allocation0 [shape = 'u32[]', space=smem, size = 0x4, offset = 0x4, fixed_abs, tag = 'smem constant byte address 0x4 - core index']
  #allocation1 [shape = 'u32[144,128]{1,0:T(1,128)}', space=vmem, size = 0x12000, scoped, tag = 'internal scratch']
  %s0 = inlined_call_operand.vmem [shape: f32[16,32], index: 0, kind: input, shape index: {}]
  %s1 = inlined_call_operand.vmem [shape: f32[1,32], index: 1, kind: input, shape index: {}]
  %s2 = inlined_call_operand.vmem [shape: f32[1,32], index: 2, kind: input, shape index: {}]
  %s3 = inlined_call_operand.vmem [shape: f32[32,128], index: 3, kind: input, shape index: {}]
  %s4 = inlined_call_operand.vmem [shape: f32[1,128], index: 4, kind: input, shape index: {}]
  %s5 = inlined_call_operand.vmem [shape: f32[128,32], index: 5, kind: input, shape index: {}]
  %s6 = inlined_call_operand.vmem [shape: f32[1,32], index: 6, kind: input, shape index: {}]
  %s7 = inlined_call_operand.hbm [shape: f32[16,32], index: 7, kind: output, shape index: {}]
  %s8 = sld [smem:[#allocation0]]
  $region38: #{tpu_custom_call.1} parent=0
    _
  %s10 = ssub.s32 1, %s8
  %s11 = scalar_select 0, %s10, %s8
  $region1: #{tpu_custom_call.1} parent=0
    #allocation2 [shape = 'u8[8192]{0}', space=vmem, size = 0x2000, scoped, tag = 'output window, operand 0, single buffered']
    #allocation3 [shape = 's32[1]{0}', space=sflag, size = 0x4, scoped, tag = 'scoped memory for tpu_custom_call.1']
    %12 = vsyncpa [#allocation3], 0
    // Predicated region
    $region2: #{tpu_custom_call.1} parent=1 // pred_check
      _
    $region3: #{tpu_custom_call.1} parent=1 // pred_check_branch
      %14 = sbr.rel (0) target = $region5
    $region4: #{tpu_custom_call.1} parent=1 // pred_region
      _
    $region5: #{tpu_custom_call.1} parent=1 // pred_fallthru
      _
    // Predicated region
    $region6: #{tpu_custom_call.1} parent=1 // pred_check
      _
    $region7: #{tpu_custom_call.1} parent=1 // pred_check_branch
      %16 = sbr.rel (0) target = $region9
    $region8: #{tpu_custom_call.1} parent=1 // pred_region
      _
    $region9: #{tpu_custom_call.1} parent=1 // pred_fallthru
      _
    // Predicated region
    $region10: #{tpu_custom_call.1} parent=1 // pred_check
      _
    $region11: #{tpu_custom_call.1} parent=1 // pred_check_branch
      %18 = sbr.rel (0) target = $region13
    $region12: #{tpu_custom_call.1} parent=1 // pred_region
      _
    $region13: #{tpu_custom_call.1} parent=1 // pred_fallthru
      _
    // Predicated region
    $region14: #{tpu_custom_call.1} parent=1 // pred_check
      _
    $region15: #{tpu_custom_call.1} parent=1 // pred_check_branch
      %20 = sbr.rel (0) target = $region17
    $region16: #{tpu_custom_call.1} parent=1 // pred_region
      _
    $region17: #{tpu_custom_call.1} parent=1 // pred_fallthru
      _
    // Predicated region
    $region18: #{tpu_custom_call.1} parent=1 // pred_check
      _
    $region19: #{tpu_custom_call.1} parent=1 // pred_check_branch
      %22 = sbr.rel (0) target = $region21
    $region20: #{tpu_custom_call.1} parent=1 // pred_region
      _
    $region21: #{tpu_custom_call.1} parent=1 // pred_fallthru
      _
    // Predicated region
    $region22: #{tpu_custom_call.1} parent=1 // pred_check
      _
    $region23: #{tpu_custom_call.1} parent=1 // pred_check_branch
      %24 = sbr.rel (0) target = $region25
    $region24: #{tpu_custom_call.1} parent=1 // pred_region
      _
    $region25: #{tpu_custom_call.1} parent=1 // pred_fallthru
      _
    // Predicated region
    $region26: #{tpu_custom_call.1} parent=1 // pred_check
      _
    $region27: #{tpu_custom_call.1} parent=1 // pred_check_branch
      %26 = sbr.rel (0) target = $region29
    $region28: #{tpu_custom_call.1} parent=1 // pred_region
      _
    $region29: #{tpu_custom_call.1} parent=1 // pred_fallthru
      _
    %v27 = vld [vmem:[%s0] sm:$0xff]
    %v28 = vld [vmem:[%s0 + $0x8] sm:$0xff]
    %vm29 = vcmask 261120
    %v30 = vsel %vm29, %v27, 0.0
    %31 = vadd.xlane.f32.xlu0 %v30
    %v32 = vpop.xlane.xlu0 %31
    %v33 = vsel %vm29, %v28, 0.0
    %34 = vadd.xlane.f32.xlu0 %v33
    %v35 = vpop.xlane.xlu0 %34
    %v36 = vrcp.pop 32.0
    %v37 = vmul.f32 %v32, %v36
    %v38 = vmul.f32 %v35, %v36
    %v39 = vsub.f32 %v27, %v37
    %v40 = vsub.f32 %v28, %v38
    %v41 = vmul.f32 %v39, %v39
    %v42 = vmul.f32 %v40, %v40
    %v43 = vsel %vm29, %v41, 0.0
    %44 = vadd.xlane.f32.xlu0 %v43
    %v45 = vpop.xlane.xlu0 %44
    %v46 = vsel %vm29, %v42, 0.0
    %47 = vadd.xlane.f32.xlu0 %v46
    %v48 = vpop.xlane.xlu0 %47
    %v49 = vmul.f32 %v45, %v36
    %v50 = vmul.f32 %v48, %v36
    %v51 = vadd.f32 %v49, 1e-05
    %v52 = vadd.f32 %v50, 1e-05
    %v53 = vrsqrt.pop %v51
    %v54 = vrsqrt.pop %v52
    %v55 = vmul.f32 %v39, %v53
    %v56 = vmul.f32 %v40, %v54
    %v57 = vld [vmem:[%s1] sm:$0x1]
    %v59 = vlaneseq
    %v60 = vshrl.u32 %v59, 7
    %v61 = vsub.s32 0, %v60
    %v62 = vrot.slane %v57, %v61
    %v64 = vmul.f32 %v55, %v62
    %v65 = vmul.f32 %v56, %v62
    %v66 = vld [vmem:[%s2] sm:$0x1]
    %v68 = vlaneseq
    %v69 = vshrl.u32 %v68, 7
    %v70 = vsub.s32 0, %v69
    %v71 = vrot.slane %v66, %v70
    %v73 = vadd.f32 %v64, %v71
    %v74 = vadd.f32 %v65, %v71
    %v75 = vld [vmem:[%s3] sm:$0xff]
    %v76 = vld [vmem:[%s3 + $0x8] sm:$0xff]
    %v77 = vld [vmem:[%s3 + $0x10] sm:$0xff]
    %v78 = vld [vmem:[%s3 + $0x18] sm:$0xff]
    %v79 = vld [vmem:[%s4] sm:$0x1]
    %v81 = vlaneseq
    %v82 = vshrl.u32 %v81, 7
    %v83 = vsub.s32 0, %v82
    %v84 = vrot.slane %v79, %v83
    %v87 = vsel %vm29, %v73, 0
    %v90 = vsel %vm29, %v74, 0
    %92 = vmatprep.subr.mxu0 0.0
    %93 = vmatpush1.msra.mxu0 %v75
    %94 = vmatprep.subr.mxu0 0.0
    %95 = vmatpush1.msra.mxu0 %v76
    %96 = vmatprep.subr.mxu0 0.0
    %97 = vmatpush1.msra.mxu0 %v77
    %98 = vmatprep.subr.mxu0 0.0
    %99 = vmatpush1.msra.mxu0 %v78
    %100 = vmatprep.subr.mxu0 0.0
    %101 = vmatpush1.msra.mxu0 0.0
    %102 = vmatprep.subr.mxu0 0.0
    %103 = vmatpush1.msra.mxu0 0.0
    %104 = vmatprep.subr.mxu0 0.0
    %105 = vmatpush1.msra.mxu0 0.0
    %106 = vmatprep.subr.mxu0 0.0
    %107 = vmatpush1.msra.mxu0 0.0
    %108 = vmatprep.subr.mxu0 0.0
    %109 = vmatpush1.msra.mxu0 0.0
    %110 = vmatprep.subr.mxu0 0.0
    %111 = vmatpush1.msra.mxu0 0.0
    %112 = vmatprep.subr.mxu0 0.0
    %113 = vmatpush1.msra.mxu0 0.0
    %114 = vmatprep.subr.mxu0 0.0
    %115 = vmatpush1.msra.mxu0 0.0
    %116 = vmatprep.subr.mxu0 0.0
    %117 = vmatpush1.msra.mxu0 0.0
    %118 = vmatprep.subr.mxu0 0.0
    %119 = vmatpush1.msra.mxu0 0.0
    %120 = vmatprep.subr.mxu0 0.0
    %121 = vmatpush1.msra.mxu0 0.0
    %122 = vmatprep.subr.mxu0 0.0
    %123 = vmatpush1.msra.mxu0 0.0
    %124 = vmatprep.subr.mxu0 0.0
    %125 = vmatpush1.msra.mxu0 0.0
    %126 = vmatprep.subr.mxu0 0.0
    %127 = vmatpush1.msra.mxu0 0.0
    %128 = vmatprep.subr.mxu0 0.0
    %129 = vmatpush1.msra.mxu0 0.0
    %130 = vmatprep.subr.mxu0 0.0
    %131 = vmatpush1.msra.mxu0 0.0
    %132 = vmatprep.subr.mxu0 0.0
    %133 = vmatpush1.msra.mxu0 0.0
    %134 = vmatprep.subr.mxu0 0.0
    %135 = vmatpush1.msra.mxu0 0.0
    %136 = vmatprep.subr.mxu0 0.0
    %137 = vmatpush1.msra.mxu0 0.0
    %138 = vmatprep.subr.mxu0 0.0
    %139 = vmatpush1.msra.mxu0 0.0
    %140 = vmatprep.subr.mxu0 0.0
    %141 = vmatpush1.msra.mxu0 0.0
    %142 = vmatprep.subr.mxu0 0.0
    %143 = vmatpush1.msra.mxu0 0.0
    %144 = vmatprep.subr.mxu0 0.0
    %145 = vmatpush1.msra.mxu0 0.0
    %146 = vmatprep.subr.mxu0 0.0
    %147 = vmatpush1.msra.mxu0 0.0
    %148 = vmatprep.subr.mxu0 0.0
    %149 = vmatpush1.msra.mxu0 0.0
    %150 = vmatprep.subr.mxu0 0.0
    %151 = vmatpush1.msra.mxu0 0.0
    %152 = vmatprep.subr.mxu0 0.0
    %153 = vmatpush1.msra.mxu0 0.0
    %154 = vmatprep.subr.mxu0 0.0
    %155 = vmatpush1.msra.mxu0 0.0
    %156 = vmatprep.mubr.f32.mxu0 0.0
    %157 = vmatmul.mubr.f32.gmra.mrb[0].mxu0 %v87
    %v158 = vpop.f32.mrb[0].mxu0
    %v159 = vadd.f32 %v84, %v158
    %v160 = vpop.f32.mrb[0].mxu0
    %161 = vmatprep.mubr.f32.mxu0 0.0
    %162 = vmatmul.mubr.f32.gmra.mrb[0].mxu0 %v90
    %v163 = vpop.f32.mrb[0].mxu0
    %v164 = vadd.f32 %v84, %v163
    %v165 = vpop.f32.mrb[0].mxu0
    %166 = vdwg.mxu0
    %v167 = vmul.f32 %v159, 0.5
    %v168 = vmul.f32 %v164, 0.5
    %v169 = vmul.f32 %v159, 0.70710677
    %v170 = vmul.f32 %v164, 0.70710677
    %v171 = verf.f32.pop %v169
    %v172 = verf.f32.pop %v170
    %v173 = vadd.f32 %v171, 1.0
    %v174 = vadd.f32 %v172, 1.0
    %v175 = vmul.f32 %v167, %v173
    %v176 = vmul.f32 %v168, %v174
    %v177 = vld [vmem:[%s5] sm:$0xff]
    %v178 = vld [vmem:[%s5 + $0x8] sm:$0xff]
    %v179 = vld [vmem:[%s5 + $0x10] sm:$0xff]
    %v180 = vld [vmem:[%s5 + $0x18] sm:$0xff]
    %v181 = vld [vmem:[%s5 + $0x20] sm:$0xff]
    %v182 = vld [vmem:[%s5 + $0x28] sm:$0xff]
    %v183 = vld [vmem:[%s5 + $0x30] sm:$0xff]
    %v184 = vld [vmem:[%s5 + $0x38] sm:$0xff]
    %v185 = vld [vmem:[%s5 + $0x40] sm:$0xff]
    %v186 = vld [vmem:[%s5 + $0x48] sm:$0xff]
    %v187 = vld [vmem:[%s5 + $0x50] sm:$0xff]
    %v188 = vld [vmem:[%s5 + $0x58] sm:$0xff]
    %v189 = vld [vmem:[%s5 + $0x60] sm:$0xff]
    %v190 = vld [vmem:[%s5 + $0x68] sm:$0xff]
    %v191 = vld [vmem:[%s5 + $0x70] sm:$0xff]
    %v192 = vld [vmem:[%s5 + $0x78] sm:$0xff]
    %v193 = vld [vmem:[%s6] sm:$0x1]
    %v195 = vlaneseq
    %v196 = vshrl.u32 %v195, 7
    %v197 = vsub.s32 0, %v196
    %v198 = vrot.slane %v193, %v197
    %200 = vmatprep.subr.mxu0 0.0
    %201 = vmatpush1.msra.mxu0 %v177
    %202 = vmatprep.subr.mxu0 0.0
    %203 = vmatpush1.msra.mxu0 %v178
    %204 = vmatprep.subr.mxu0 0.0
    %205 = vmatpush1.msra.mxu0 %v179
    %206 = vmatprep.subr.mxu0 0.0
    %207 = vmatpush1.msra.mxu0 %v180
    %208 = vmatprep.subr.mxu0 0.0
    %209 = vmatpush1.msra.mxu0 %v181
    %210 = vmatprep.subr.mxu0 0.0
    %211 = vmatpush1.msra.mxu0 %v182
    %212 = vmatprep.subr.mxu0 0.0
    %213 = vmatpush1.msra.mxu0 %v183
    %214 = vmatprep.subr.mxu0 0.0
    %215 = vmatpush1.msra.mxu0 %v184
    %216 = vmatprep.subr.mxu0 0.0
    %217 = vmatpush1.msra.mxu0 %v185
    %218 = vmatprep.subr.mxu0 0.0
    %219 = vmatpush1.msra.mxu0 %v186
    %220 = vmatprep.subr.mxu0 0.0
    %221 = vmatpush1.msra.mxu0 %v187
    %222 = vmatprep.subr.mxu0 0.0
    %223 = vmatpush1.msra.mxu0 %v188
    %224 = vmatprep.subr.mxu0 0.0
    %225 = vmatpush1.msra.mxu0 %v189
    %226 = vmatprep.subr.mxu0 0.0
    %227 = vmatpush1.msra.mxu0 %v190
    %228 = vmatprep.subr.mxu0 0.0
    %229 = vmatpush1.msra.mxu0 %v191
    %230 = vmatprep.subr.mxu0 0.0
    %231 = vmatpush1.msra.mxu0 %v192
    %232 = vmatprep.subr.mxu0 0.0
    %233 = vmatpush1.msra.mxu0 0.0
    %234 = vmatprep.subr.mxu0 0.0
    %235 = vmatpush1.msra.mxu0 0.0
    %236 = vmatprep.subr.mxu0 0.0
    %237 = vmatpush1.msra.mxu0 0.0
    %238 = vmatprep.subr.mxu0 0.0
    %239 = vmatpush1.msra.mxu0 0.0
    %240 = vmatprep.subr.mxu0 0.0
    %241 = vmatpush1.msra.mxu0 0.0
    %242 = vmatprep.subr.mxu0 0.0
    %243 = vmatpush1.msra.mxu0 0.0
    %244 = vmatprep.subr.mxu0 0.0
    %245 = vmatpush1.msra.mxu0 0.0
    %246 = vmatprep.subr.mxu0 0.0
    %247 = vmatpush1.msra.mxu0 0.0
    %248 = vmatprep.subr.mxu0 0.0
    %249 = vmatpush1.msra.mxu0 0.0
    %250 = vmatprep.subr.mxu0 0.0
    %251 = vmatpush1.msra.mxu0 0.0
    %252 = vmatprep.subr.mxu0 0.0
    %253 = vmatpush1.msra.mxu0 0.0
    %254 = vmatprep.subr.mxu0 0.0
    %255 = vmatpush1.msra.mxu0 0.0
    %256 = vmatprep.subr.mxu0 0.0
    %257 = vmatpush1.msra.mxu0 0.0
    %258 = vmatprep.subr.mxu0 0.0
    %259 = vmatpush1.msra.mxu0 0.0
    %260 = vmatprep.subr.mxu0 0.0
    %261 = vmatpush1.msra.mxu0 0.0
    %262 = vmatprep.subr.mxu0 0.0
    %263 = vmatpush1.msra.mxu0 0.0
    %264 = vmatprep.mubr.f32.mxu0 0.0
    %265 = vmatmul.mubr.f32.gmra.mrb[0].mxu0 %v175
    %v266 = vpop.f32.mrb[0].mxu0
    %v267 = vadd.f32 %v198, %v266
    %v268 = vpop.f32.mrb[0].mxu0
    %269 = vmatprep.mubr.f32.mxu0 0.0
    %270 = vmatmul.mubr.f32.gmra.mrb[0].mxu0 %v176
    %v271 = vpop.f32.mrb[0].mxu0
    %v272 = vadd.f32 %v198, %v271
    %v273 = vpop.f32.mrb[0].mxu0
    %274 = vdwg.mxu0
    %275 = vst.msk [vmem:[#allocation2] sm:$0xff] %vm29, %v267
    %276 = vst.msk [vmem:[#allocation2 + $0x8] sm:$0xff] %vm29, %v272
    // Predicated region
    $region30: #{tpu_custom_call.1} parent=1 // pred_check
      _
    $region31: #{tpu_custom_call.1} parent=1 // pred_check_branch
      %278 = sbr.rel (0) target = $region33
    $region32: #{tpu_custom_call.1} parent=1 // pred_region
      %s280 = ssub.s32 256, 256
      %281 = vsyncadd [#allocation3], %s280
      %s282 = sshll.u32 [#allocation2], 4
      %s283 = int_to_ptr.vmem [resolvable:$true] %s282
      %288 = dma.vmem_to_hbm [thread:$0]  %s283, 256, %s7, [#allocation3], 128, 128, 8
    $region33: #{tpu_custom_call.1} parent=1 // pred_fallthru
      _
    // Predicated region
    $region34: #{tpu_custom_call.1} parent=1 // pred_check
      _
    $region35: #{tpu_custom_call.1} parent=1 // pred_check_branch
      %290 = sbr.rel (0) target = $region37
    $region36: #{tpu_custom_call.1} parent=1 // pred_region
      %291 = dma.done [#allocation3], 256
    $region37: #{tpu_custom_call.1} parent=1 // pred_fallthru
      _
    %292 = vsyncpa [#allocation3], 1

</llo_original>
